<compile_context>
chip_gen: v6e
topology: v6e:2x2x1
jax: 0.10.0
libtpu: 0.0.40
codegen_flags: <defaults>
</compile_context>

<pallas_src>
import functools

import jax
import jax.numpy as jnp
from jax.experimental import pallas as pl
from jax.experimental.pallas import tpu as pltpu

_LANE = 128      # vreg lane width
_SUBLANE = 8     # f32 sublane count


# ----------------------------------------------------------------------------
# Parameter-setup glue (plain JAX, runs once).
# ----------------------------------------------------------------------------
def _make_absolute_pe_weight(context_length: int, embedding_dim: int, base: float,
                             dtype=jnp.float32) -> jnp.ndarray:
    """Reproduces AbsolutePE._generate_positional_embeddings exactly.

    weight[p, 2i]   = sin(p * inv_freq[i])
    weight[p, 2i+1] = cos(p * inv_freq[i])
    """
    if embedding_dim % 2 != 0:
        embedding_dim += 1
    half_idx = jnp.arange(0, embedding_dim, 2, dtype=jnp.float32)
    power = 2.0 * half_idx / embedding_dim
    inv_freq = 1.0 / (base ** power)                              # (half,)
    pos = jnp.arange(0, context_length, dtype=jnp.float32)        # (T_ctx,)
    angles = jnp.outer(pos, inv_freq)                             # (T_ctx, half)
    sin = jnp.sin(angles).reshape(-1)
    cos = jnp.cos(angles).reshape(-1)
    sinusoids = jnp.stack((sin, cos))                             # (2, T_ctx*half)
    weight = sinusoids.T.reshape(context_length, embedding_dim)   # interleave
    return weight.astype(dtype)


def precompute_flat_pe(weight: jnp.ndarray, T: int, C: int, dtype) -> jnp.ndarray:
    """Hoisted per-(T, C) weight prep: slice + cast + flatten ONCE, cached as a
    parameter, so the forward never re-reads/re-writes the table through an
    extra XLA elementwise pass."""
    assert T <= weight.shape[0], (
        f"sequence length {T} exceeds context_length {weight.shape[0]}")
    assert C <= weight.shape[1], (
        f"embedding dim {C} exceeds table width {weight.shape[1]}")
    return jnp.asarray(weight)[:T, :C].astype(dtype).reshape(1, T * C)


# ----------------------------------------------------------------------------
# Generation-aware tuning.
# ----------------------------------------------------------------------------
@functools.lru_cache(maxsize=1)
def _tpu_tuning():
    """Returns (target_block_bytes, vmem_limit_bytes) for the local TPU."""
    try:
        kind = jax.devices()[0].device_kind.lower()
    except Exception:
        kind = ""
    if "v7" in kind or "7x" in kind:
        # ~3.2 TB/s HBM per TC: 8 MiB blocks keep the ~0.35us step overhead <7%.
        # 2x(x) + 2x(out) + w slices ~= 34 MiB, well under 64 MiB physical VMEM.
        return 8 * 1024 * 1024, 48 * 1024 * 1024
    if "v6" in kind:
        # 2x4 + 2x4 + w ~= 17 MiB fits the 32 MiB default scoped VMEM, no flags.
        return 4 * 1024 * 1024, None
    # v5e (16 MiB default scoped VMEM) or unknown: stay conservative.
    return 2 * 1024 * 1024, None


def _choose_tiles(B: int, N: int, itemsize: int, target_block_bytes: int):
    """Pick (batch_tile, lane_tile) obeying the (8, 128) layout rules."""
    # Sub-32-bit dtypes pack rows along sublanes: bf16 -> 16-row quantum, etc.
    row_quantum = _SUBLANE * max(1, 4 // itemsize)

    # ---- lane (column) tile -------------------------------------------------
    if N <= _LANE or N * row_quantum * itemsize <= target_block_bytes:
        # Full last dim is always legal and leaves no ragged column tile.
        tn = N
    else:
        tn = max(_LANE,
                 (target_block_bytes // (row_quantum * itemsize)) // _LANE * _LANE)
        tn = min(tn, (N // _LANE) * _LANE)
        # Prefer a 128-multiple that divides N so the trailing column tile stays
        # lane-dense (unmasked vst) instead of a heavily-masked partial store.
        cand = tn
        while cand >= max(_LANE, tn // 2):
            if N % cand == 0:
                tn = cand
                break
            cand -= _LANE

    # ---- batch (sublane) tile -----------------------------------------------
    if B <= row_quantum:
        tb = B                                    # full dim: always legal
    else:
        tb = row_quantum
        while (tb + row_quantum) <= B and \
                (tb + row_quantum) * tn * itemsize <= target_block_bytes:
            tb += row_quantum
    return tb, tn


# ----------------------------------------------------------------------------
# Kernel + wrapper.
# ----------------------------------------------------------------------------
def _add_pe_kernel(x_ref, w_ref, o_ref):
    # x_ref: (tb, tn) tile of the flattened input; w_ref: (1, tn) PE tile,
    # broadcast across the batch-tile rows.
    o_ref[...] = x_ref[...] + w_ref[...]


@jax.jit
def absolute_pe_forward(x: jnp.ndarray, w_flat: jnp.ndarray) -> jnp.ndarray:
    """x: (B, T, C); w_flat: (1, T*C) pre-sliced/cast/flattened PE table.

    Returns x + weight[None, :T, :C] (same semantics as AbsolutePE.forward).
    """
    B, T, C = x.shape
    N = T * C
    assert w_flat.shape == (1, N), f"w_flat shape {w_flat.shape} != (1, {N})"

    x2 = x.reshape(B, N)                          # lane-dense flat view

    itemsize = jnp.dtype(x.dtype).itemsize
    target_block_bytes, vmem_limit = _tpu_tuning()
    tb, tn = _choose_tiles(B, N, itemsize, target_block_bytes)
    grid = (pl.cdiv(N, tn), pl.cdiv(B, tb))       # batch axis innermost

    cost = pl.CostEstimate(
        flops=B * N,
        transcendentals=0,
        bytes_accessed=(2 * B * N + N) * itemsize,
    )

    compiler_params = pltpu.CompilerParams(
        # Both axes are independent (no accumulator), so both may be sharded
        # across v7x's two TensorCores; no-op on single-TC v5e/v6e.
        dimension_semantics=("parallel", "parallel"),
        vmem_limit_bytes=vmem_limit,
    )

    out2 = pl.pallas_call(
        _add_pe_kernel,
        out_shape=jax.ShapeDtypeStruct((B, N), x.dtype),
        grid_spec=pl.GridSpec(
            grid=grid,
            in_specs=[
                pl.BlockSpec((tb, tn), lambda j, b: (b, j)),   # x tile
                pl.BlockSpec((1, tn), lambda j, b: (0, j)),    # PE tile (resident over b)
            ],
            out_specs=pl.BlockSpec((tb, tn), lambda j, b: (b, j)),
        ),
        compiler_params=compiler_params,
        cost_estimate=cost,
        # NOTE: input_output_aliases={0: 0} would make this an in-place update
        # when the caller can donate x; omitted here because the test below
        # reuses x for the reference check (XLA would insert a copy anyway).
    )(x2, w_flat.astype(x.dtype))

    return out2.reshape(B, T, C)


# Convenience wrapper matching the module's forward(x) signature when the raw
# (context_length, embedding_dim) table is handy; prep is still a one-liner the
# caller should cache per (T, C, dtype).
def absolute_pe_forward_from_table(x: jnp.ndarray, weight: jnp.ndarray) -> jnp.ndarray:
    _, T, C = x.shape
    w_flat = precompute_flat_pe(weight, T, C, x.dtype)
    return absolute_pe_forward(x, w_flat)


if __name__ == "__main__":
    # Small, module-consistent shapes.
    context_length = 16
    embedding_dim = 32
    base = 10000.0

    B, T, C = 2, 8, 32   # T <= context_length, C <= embedding_dim

    key = jax.random.PRNGKey(0)
    x = jax.random.normal(key, (B, T, C), dtype=jnp.float32)

    weight = _make_absolute_pe_weight(context_length, embedding_dim, base)

    # Parameter prep hoisted out of the per-call path (cached like a buffer).
    w_flat = precompute_flat_pe(weight, T, C, x.dtype)

    out = absolute_pe_forward(x, w_flat)
    out = jax.block_until_ready(out)

    # Reference check against plain-JAX semantics of the PyTorch forward.
    ref = x + weight[None, :T, :C]
    assert out.shape == (B, T, C)
    assert jnp.allclose(out, ref, atol=1e-6), "mismatch vs reference"

    print("KERNEL_OK")
</pallas_src>

<mosaic_0001>
module attributes {stable_mosaic.version = 11 : i64} {
  func.func @_add_pe_kernel(%arg0: i32, %arg1: i32, %arg2: memref<2x256xf32, #tpu.memory_space<vmem>>, %arg3: memref<1x256xf32, #tpu.memory_space<vmem>>, %arg4: memref<2x256xf32, #tpu.memory_space<vmem>>) attributes {dimension_semantics = [#tpu.dimension_semantics<parallel>, #tpu.dimension_semantics<parallel>], iteration_bounds = array<i64: 1, 1>, scalar_prefetch = 0 : i64, scratch_operands = 0 : i64, tpu.core_type = #tpu.core_type<tc>, window_params = [{transform_indices = @transform_0, window_bounds = array<i64: 2, 256>}, {transform_indices = @transform_1, window_bounds = array<i64: 1, 256>}, {transform_indices = @transform_2, window_bounds = array<i64: 2, 256>}]} {
    %c0 = arith.constant 0 : index
    %c0_0 = arith.constant 0 : index
    %0 = vector.load %arg2[%c0, %c0_0] : memref<2x256xf32, #tpu.memory_space<vmem>>, vector<2x256xf32>
    %c0_1 = arith.constant 0 : index
    %c0_2 = arith.constant 0 : index
    %1 = vector.load %arg3[%c0_1, %c0_2] : memref<1x256xf32, #tpu.memory_space<vmem>>, vector<1x256xf32>
    %2 = vector.broadcast %1 : vector<1x256xf32> to vector<2x256xf32>
    %3 = arith.addf %0, %2 : vector<2x256xf32>
    %c0_3 = arith.constant 0 : index
    %c0_4 = arith.constant 0 : index
    %4 = vector.load %arg4[%c0_3, %c0_4] : memref<2x256xf32, #tpu.memory_space<vmem>>, vector<2x256xf32>
    tpu.vector_store %arg4[%c0_3, %c0_4], %3 {strides = array<i32>} : memref<2x256xf32, #tpu.memory_space<vmem>>, vector<2x256xf32>,
    return
  }
  func.func @transform_0(%arg0: i32, %arg1: i32) -> (i32, i32) {
    %c0_i32 = arith.constant 0 : i32
    return %arg1, %arg0 : i32, i32
  }
  func.func @transform_1(%arg0: i32, %arg1: i32) -> (i32, i32) {
    %c0_i32 = arith.constant 0 : i32
    %c0_i32_0 = arith.constant 0 : i32
    return %c0_i32, %arg0 : i32, i32
  }
  func.func @transform_2(%arg0: i32, %arg1: i32) -> (i32, i32) {
    %c0_i32 = arith.constant 0 : i32
    return %arg1, %arg0 : i32, i32
  }
}

</mosaic_0001>

<llo_original>
// kernel: absolute_pe_forward.1
$region0: #{absolute_pe_forward.1}
  #allocation0 [shape = 'u32[]', space=smem, size = 0x4, offset = 0x4, fixed_abs, tag = 'smem constant byte address 0x4 - core index']
  #allocation1 [shape = 'u32[144,128]{1,0:T(1,128)}', space=vmem, size = 0x12000, scoped, tag = 'internal scratch']
  %s0 = inlined_call_operand.vmem [shape: f32[2,256], index: 0, kind: input, shape index: {}]
  %s1 = inlined_call_operand.vmem [shape: f32[1,256], index: 1, kind: input, shape index: {}]
  %s2 = inlined_call_operand.vmem [shape: f32[2,256], index: 2, kind: output, shape index: {}]
  %s3 = sld [smem:[#allocation0]]
  $region18: #{absolute_pe_forward.1} parent=0
    _
  %s5 = ssub.s32 1, %s3
  %s6 = scalar_select 0, %s5, %s3
  // Predicated region
  $region2: #{absolute_pe_forward.1} parent=0 // pred_check
    _
  $region3: #{absolute_pe_forward.1} parent=0 // pred_check_branch
    %8 = sbr.rel (0) target = $region5
  $region4: #{absolute_pe_forward.1} parent=0 // pred_region
    _
  $region5: #{absolute_pe_forward.1} parent=0 // pred_fallthru
    _
  // Predicated region
  $region6: #{absolute_pe_forward.1} parent=0 // pred_check
    _
  $region7: #{absolute_pe_forward.1} parent=0 // pred_check_branch
    %10 = sbr.rel (0) target = $region9
  $region8: #{absolute_pe_forward.1} parent=0 // pred_region
    _
  $region9: #{absolute_pe_forward.1} parent=0 // pred_fallthru
    _
  %v11 = vld [vmem:[%s0] sm:$0xf]
  %v12 = vld [vmem:[%s1] sm:$0x3]
  %v14 = vlaneseq
  %v15 = vshrl.u32 %v14, 7
  %v16 = vsub.s32 0, %v15
  %v17 = vrot.slane %v12, %v16
  %v18 = vlaneseq
  %v19 = vshrl.u32 %v18, 7
  %v20 = vsub.s32 1, %v19
  %v21 = vrot.slane %v12, %v20
  %v22 = vcombine.low %v17, %v21
  %v24 = vunpack.c.l.s4 1983009808
  %v25 = vunpack.c.0.s8 %v24
  %v26 = vlaneseq
  %v27 = vshrl.u32 %v26, 7
  %v28 = vsub.s32 %v25, %v27
  %v29 = vrot.slane %v22, %v28
  %v31 = vadd.f32 %v11, %v29
  %32 = vst [vmem:[%s2] sm:$0xf] %v31
  // Predicated region
  $region10: #{absolute_pe_forward.1} parent=0 // pred_check
    _
  $region11: #{absolute_pe_forward.1} parent=0 // pred_check_branch
    %34 = sbr.rel (0) target = $region13
  $region12: #{absolute_pe_forward.1} parent=0 // pred_region
    _
  $region13: #{absolute_pe_forward.1} parent=0 // pred_fallthru
    _
  // Predicated region
  $region14: #{absolute_pe_forward.1} parent=0 // pred_check
    _
  $region15: #{absolute_pe_forward.1} parent=0 // pred_check_branch
    %36 = sbr.rel (0) target = $region17
  $region16: #{absolute_pe_forward.1} parent=0 // pred_region
    _
  $region17: #{absolute_pe_forward.1} parent=0 // pred_fallthru
    _

</llo_original>
